<compile_context>
chip_gen: v5e
topology: v5e:2x2
jax: 0.10.0
libtpu: 0.0.40
codegen_flags: <defaults>
</compile_context>

<pallas_src>
import functools

import jax
import jax.numpy as jnp
from jax.experimental import pallas as pl
from jax.experimental.pallas import tpu as pltpu


_SMALL_M = 512  # at/below this, run grid-less with everything resident in VMEM


# ----------------------------------------------------------------------------
# Fused kernel: whole encoder + decoder stack in one body.
# refs layout:
#   x_ref,
#   w_enc_0, b_enc_0, ..., w_enc_{L-1}, b_enc_{L-1},
#   w_dec_0, b_dec_0, ..., w_dec_{L-1}, b_dec_{L-1},
#   encoded_out_ref, decoded_out_ref
# ----------------------------------------------------------------------------
def _fused_sdae_kernel(*refs, nlayers, slope):
    x_ref = refs[0]
    enc_refs = refs[1:1 + 2 * nlayers]
    dec_refs = refs[1 + 2 * nlayers:1 + 4 * nlayers]
    enc_out_ref, dec_out_ref = refs[1 + 4 * nlayers:]

    def act(y):
        if slope == 0.0:
            return jnp.maximum(y, 0.0)             # plain ReLU: 1 VPU op
        if 0.0 < slope <= 1.0:
            return jnp.maximum(y, slope * y)       # leaky ReLU: 2 VPU ops
        return jnp.where(y >= 0, y, slope * y)     # general fallback

    def linear(h, w_ref, b_ref):
        w = w_ref[...]                             # (K, N) in matmul dtype
        b = b_ref[...]                             # (1, N) f32
        # Cast activations to the weights' dtype (bf16 by default) so the MXU
        # runs its native-rate path; accumulate in f32, bias/act in f32.
        return jnp.dot(h.astype(w.dtype), w,
                       preferred_element_type=jnp.float32) + b

    # Encoder: encoded = enc_{L-1}(lrelu(... lrelu(enc_0(x)) ...))
    h = x_ref[...]
    for i in range(nlayers):          # static unroll; shapes differ per layer
        h = linear(h, enc_refs[2 * i], enc_refs[2 * i + 1])
        if i < nlayers - 1:
            h = act(h)
    enc_out_ref[...] = h.astype(enc_out_ref.dtype)

    # Decoder: out = dec_0(lrelu(dec_1(... lrelu(dec_{L-1}(encoded)) ...)))
    out = h
    for i in reversed(range(nlayers)):
        out = linear(out, dec_refs[2 * i], dec_refs[2 * i + 1])
        if i:
            out = act(out)
    dec_out_ref[...] = out.astype(dec_out_ref.dtype)


def _choose_block_m(M, block_m):
    """Sublane-aligned batch tile with >= 2 grid steps (engages both v7x TCs)."""
    bm = min(block_m, pl.cdiv(M, 8) * 8)
    bm = max(8, (bm // 8) * 8)
    while bm > 256 and pl.cdiv(M, bm) < 2:
        bm = max(256, ((bm // 2) // 8) * 8)
    return bm


# ----------------------------------------------------------------------------
# Wrapper: one pallas_call for the whole forward pass.
#   - small M (<= _SMALL_M): grid-less, everything resident in VMEM.
#   - otherwise: cdiv-tiled batch grid ("parallel"); weights stay VMEM-resident
#     via constant index maps.  Ragged last block is padded/masked by Pallas.
# ----------------------------------------------------------------------------
def fused_sdae_forward(x, params, *, slope=0.0, block_m=1024,
                       matmul_dtype=jnp.bfloat16):
    nlayers = len(params["enc"])
    in_dim = params["enc"][0][0].shape[0]
    code_dim = params["enc"][-1][0].shape[1]

    inp = x.reshape(-1, in_dim).astype(jnp.float32)   # matches x.view(-1, in_dim)
    M = inp.shape[0]

    # Weights as (in, out) in the matmul dtype; biases as (1, N) f32 rows.
    wb = []
    for w, b in list(params["enc"]) + list(params["dec"]):
        wb.append((w.astype(matmul_dtype), b.reshape(1, -1).astype(jnp.float32)))
    args = [inp]
    for w, b2 in wb:
        args += [w, b2]

    kernel = functools.partial(_fused_sdae_kernel, nlayers=nlayers, slope=slope)
    out_shape = (jax.ShapeDtypeStruct((M, code_dim), jnp.float32),
                 jax.ShapeDtypeStruct((M, in_dim), jnp.float32))

    if M <= _SMALL_M:
        # Whole problem in VMEM, no grid (avoids per-step pipeline overhead).
        # TODO(synk): if this tiny-M path is called repeatedly with fixed
        # weights, hoist the weight DMA across calls (cross-pallas_call
        # prefetch) — at M~8 the kernel is pure launch/DMA latency.
        vmem = pl.BlockSpec(memory_space=pltpu.MemorySpace.VMEM)
        return pl.pallas_call(
            kernel,
            out_shape=out_shape,
            in_specs=[vmem] * len(args),
            out_specs=(vmem, vmem),
        )(*args)

    # Tiled path: cdiv grid over the batch (handles ragged M), weights
    # VMEM-resident via constant index maps.
    bm = _choose_block_m(M, block_m)
    grid_m = pl.cdiv(M, bm)

    in_specs = [pl.BlockSpec((bm, in_dim), lambda i: (i, 0))]
    for w, b2 in wb:
        in_specs.append(pl.BlockSpec(w.shape, lambda i: (0, 0)))
        in_specs.append(pl.BlockSpec(b2.shape, lambda i: (0, 0)))
    # encoded is only code_dim (=32) lanes wide -> masked stores; accepted.
    out_specs = (pl.BlockSpec((bm, code_dim), lambda i: (i, 0)),
                 pl.BlockSpec((bm, in_dim), lambda i: (i, 0)))

    # Advisory cost estimate so XLA schedules the custom call sensibly.
    flops_per_row = sum(2 * w.shape[0] * w.shape[1] for w, _ in wb)
    weight_bytes = sum(int(w.size) * w.dtype.itemsize +
                       int(b2.size) * b2.dtype.itemsize for w, b2 in wb)
    bytes_accessed = M * (in_dim + in_dim + code_dim) * 4 + weight_bytes
    cost = pl.CostEstimate(flops=flops_per_row * M, transcendentals=0,
                           bytes_accessed=bytes_accessed)

    # Rough VMEM budget (double-buffered activation tiles + weights + slack
    # for unrolled intermediates), capped at 48 MiB for v7x's 64 MiB VMEM.
    act_cols = in_dim + in_dim + code_dim
    vmem_est = 2 * bm * act_cols * 4 + 2 * weight_bytes
    vmem_limit = int(min(48 * 1024 * 1024,
                         max(32 * 1024 * 1024, 4 * vmem_est)))

    return pl.pallas_call(
        kernel,
        out_shape=out_shape,
        grid=(grid_m,),
        in_specs=in_specs,
        out_specs=out_specs,
        compiler_params=pltpu.CompilerParams(
            dimension_semantics=("parallel",),
            vmem_limit_bytes=vmem_limit),
        cost_estimate=cost,
    )(*args)


# ----------------------------------------------------------------------------
# Parameter construction (mirrors extractSDAE.__init__)
#   enc[i]: Linear(dim[i] -> dim[i+1]),  dec[i]: Linear(dim[i+1] -> dim[i])
#   weights ~ N(0, std=0.01) (init.normal(std=0.01)), biases = 0
# ----------------------------------------------------------------------------
def init_sdae_params(dim, key):
    nlayers = len(dim) - 1
    enc, dec = [], []
    for i in range(nlayers):
        key, k_e, k_d = jax.random.split(key, 3)
        # stored transposed relative to PyTorch: (in, out)
        w_enc = 0.01 * jax.random.normal(k_e, (dim[i], dim[i + 1]), jnp.float32)
        b_enc = jnp.zeros((dim[i + 1],), jnp.float32)
        w_dec = 0.01 * jax.random.normal(k_d, (dim[i + 1], dim[i]), jnp.float32)
        b_dec = jnp.zeros((dim[i],), jnp.float32)
        enc.append((w_enc, b_enc))
        dec.append((w_dec, b_dec))
    return {"enc": enc, "dec": dec}


# Pure-JAX reference (mirrors extractSDAE.forward) for correctness checks.
def reference_forward(x, params, *, slope=0.0):
    in_dim = params["enc"][0][0].shape[0]
    nlayers = len(params["enc"])
    inp = x.reshape(-1, in_dim)

    def lrelu(v):
        return jnp.where(v >= 0, v, slope * v)

    encoded = inp
    for i, (w, b) in enumerate(params["enc"]):
        encoded = encoded @ w + b
        if i < nlayers - 1:
            encoded = lrelu(encoded)
    out = encoded
    for i in reversed(range(nlayers)):
        w, b = params["dec"][i]
        out = out @ w + b
        if i:
            out = lrelu(out)
    return encoded, out


if __name__ == "__main__":
    key = jax.random.PRNGKey(0)
    dim = [256, 128, 64, 32]          # in_dim=256, 3 encoder / 3 decoder layers
    key, k_x, k_p, k_big = jax.random.split(key, 4)
    params = init_sdae_params(dim, k_p)

    # --- small batch, f32 matmuls: tight plumbing check ----------------------
    x = jax.random.normal(k_x, (2, 4, 256), jnp.float32)  # view(-1,256) -> (8,256)
    enc32, out32 = fused_sdae_forward(x, params, slope=0.0,
                                      matmul_dtype=jnp.float32)
    enc32 = jax.block_until_ready(enc32)
    out32 = jax.block_until_ready(out32)
    enc_ref, out_ref = reference_forward(x, params, slope=0.0)
    assert enc32.shape == (8, 32) and out32.shape == (8, 256)
    assert jnp.allclose(enc32, enc_ref, atol=1e-5, rtol=1e-5)
    assert jnp.allclose(out32, out_ref, atol=1e-5, rtol=1e-5)

    # --- small batch, default bf16 matmuls, non-zero negative_slope ----------
    encb, outb = fused_sdae_forward(x, params, slope=0.2)
    encb = jax.block_until_ready(encb)
    outb = jax.block_until_ready(outb)
    enc_ref2, out_ref2 = reference_forward(x, params, slope=0.2)
    assert jnp.allclose(encb, enc_ref2, atol=1e-4, rtol=5e-2)
    assert jnp.allclose(outb, out_ref2, atol=1e-4, rtol=5e-2)

    # --- large ragged batch: cdiv-tiled grid, bf16 MXU, parallel axis --------
    xb = jax.random.normal(k_big, (2500, 256), jnp.float32)  # 2500 % 1024 != 0
    enc_l, out_l = fused_sdae_forward(xb, params, slope=0.0)
    enc_l = jax.block_until_ready(enc_l)
    out_l = jax.block_until_ready(out_l)
    enc_l_ref, out_l_ref = reference_forward(xb, params, slope=0.0)
    assert enc_l.shape == (2500, 32) and out_l.shape == (2500, 256)
    assert jnp.allclose(enc_l, enc_l_ref, atol=1e-4, rtol=5e-2)
    assert jnp.allclose(out_l, out_l_ref, atol=1e-4, rtol=5e-2)

    print("KERNEL_OK")
</pallas_src>

<mosaic_0001>
module attributes {stable_mosaic.version = 11 : i64} {
  func.func @_fused_sdae_kernel(%arg0: memref<8x256xf32, #tpu.memory_space<vmem>>, %arg1: memref<256x128xf32, #tpu.memory_space<vmem>>, %arg2: memref<1x128xf32, #tpu.memory_space<vmem>>, %arg3: memref<128x64xf32, #tpu.memory_space<vmem>>, %arg4: memref<1x64xf32, #tpu.memory_space<vmem>>, %arg5: memref<64x32xf32, #tpu.memory_space<vmem>>, %arg6: memref<1x32xf32, #tpu.memory_space<vmem>>, %arg7: memref<128x256xf32, #tpu.memory_space<vmem>>, %arg8: memref<1x256xf32, #tpu.memory_space<vmem>>, %arg9: memref<64x128xf32, #tpu.memory_space<vmem>>, %arg10: memref<1x128xf32, #tpu.memory_space<vmem>>, %arg11: memref<32x64xf32, #tpu.memory_space<vmem>>, %arg12: memref<1x64xf32, #tpu.memory_space<vmem>>, %arg13: memref<8x32xf32, #tpu.memory_space<vmem>>, %arg14: memref<8x256xf32, #tpu.memory_space<vmem>>) attributes {dimension_semantics = [], scalar_prefetch = 0 : i64, scratch_operands = 0 : i64, tpu.core_type = #tpu.core_type<tc>} {
    %c0 = arith.constant 0 : index
    %c0_0 = arith.constant 0 : index
    %0 = vector.load %arg0[%c0, %c0_0] : memref<8x256xf32, #tpu.memory_space<vmem>>, vector<8x256xf32>
    %c0_1 = arith.constant 0 : index
    %c0_2 = arith.constant 0 : index
    %1 = vector.load %arg1[%c0_1, %c0_2] : memref<256x128xf32, #tpu.memory_space<vmem>>, vector<256x128xf32>
    %c0_3 = arith.constant 0 : index
    %c0_4 = arith.constant 0 : index
    %2 = vector.load %arg2[%c0_3, %c0_4] : memref<1x128xf32, #tpu.memory_space<vmem>>, vector<1x128xf32>
    %cst = arith.constant dense<0.000000e+00> : vector<8x128xf32>
    %3 = tpu.matmul %0, %1, %cst {dimension_numbers = #tpu.dot_dimension_numbers<[1], [0], [0], [1], [0, 0, 1, 1], [], []>} : vector<8x256xf32>, vector<256x128xf32>, vector<8x128xf32> -> vector<8x128xf32>
    %4 = vector.broadcast %2 : vector<1x128xf32> to vector<8x128xf32>
    %5 = arith.addf %3, %4 : vector<8x128xf32>
    %cst_5 = arith.constant 0.000000e+00 : f32
    %6 = vector.broadcast %cst_5 : f32 to vector<8x128xf32>
    %7 = arith.maximumf %5, %6 : vector<8x128xf32>
    %c0_6 = arith.constant 0 : index
    %c0_7 = arith.constant 0 : index
    %8 = vector.load %arg3[%c0_6, %c0_7] : memref<128x64xf32, #tpu.memory_space<vmem>>, vector<128x64xf32>
    %c0_8 = arith.constant 0 : index
    %c0_9 = arith.constant 0 : index
    %9 = vector.load %arg4[%c0_8, %c0_9] : memref<1x64xf32, #tpu.memory_space<vmem>>, vector<1x64xf32>
    %cst_10 = arith.constant dense<0.000000e+00> : vector<8x64xf32>
    %10 = tpu.matmul %7, %8, %cst_10 {dimension_numbers = #tpu.dot_dimension_numbers<[1], [0], [0], [1], [0, 0, 1, 1], [], []>} : vector<8x128xf32>, vector<128x64xf32>, vector<8x64xf32> -> vector<8x64xf32>
    %11 = vector.broadcast %9 : vector<1x64xf32> to vector<8x64xf32>
    %12 = arith.addf %10, %11 : vector<8x64xf32>
    %cst_11 = arith.constant 0.000000e+00 : f32
    %13 = vector.broadcast %cst_11 : f32 to vector<8x64xf32>
    %14 = arith.maximumf %12, %13 : vector<8x64xf32>
    %c0_12 = arith.constant 0 : index
    %c0_13 = arith.constant 0 : index
    %15 = vector.load %arg5[%c0_12, %c0_13] : memref<64x32xf32, #tpu.memory_space<vmem>>, vector<64x32xf32>
    %c0_14 = arith.constant 0 : index
    %c0_15 = arith.constant 0 : index
    %16 = vector.load %arg6[%c0_14, %c0_15] : memref<1x32xf32, #tpu.memory_space<vmem>>, vector<1x32xf32>
    %cst_16 = arith.constant dense<0.000000e+00> : vector<8x32xf32>
    %17 = tpu.matmul %14, %15, %cst_16 {dimension_numbers = #tpu.dot_dimension_numbers<[1], [0], [0], [1], [0, 0, 1, 1], [], []>} : vector<8x64xf32>, vector<64x32xf32>, vector<8x32xf32> -> vector<8x32xf32>
    %18 = vector.broadcast %16 : vector<1x32xf32> to vector<8x32xf32>
    %19 = arith.addf %17, %18 : vector<8x32xf32>
    %c0_17 = arith.constant 0 : index
    %c0_18 = arith.constant 0 : index
    %20 = vector.load %arg13[%c0_17, %c0_18] : memref<8x32xf32, #tpu.memory_space<vmem>>, vector<8x32xf32>
    tpu.vector_store %arg13[%c0_17, %c0_18], %19 {strides = array<i32>} : memref<8x32xf32, #tpu.memory_space<vmem>>, vector<8x32xf32>,
    %c0_19 = arith.constant 0 : index
    %c0_20 = arith.constant 0 : index
    %21 = vector.load %arg11[%c0_19, %c0_20] : memref<32x64xf32, #tpu.memory_space<vmem>>, vector<32x64xf32>
    %c0_21 = arith.constant 0 : index
    %c0_22 = arith.constant 0 : index
    %22 = vector.load %arg12[%c0_21, %c0_22] : memref<1x64xf32, #tpu.memory_space<vmem>>, vector<1x64xf32>
    %cst_23 = arith.constant dense<0.000000e+00> : vector<8x64xf32>
    %23 = tpu.matmul %19, %21, %cst_23 {dimension_numbers = #tpu.dot_dimension_numbers<[1], [0], [0], [1], [0, 0, 1, 1], [], []>} : vector<8x32xf32>, vector<32x64xf32>, vector<8x64xf32> -> vector<8x64xf32>
    %24 = vector.broadcast %22 : vector<1x64xf32> to vector<8x64xf32>
    %25 = arith.addf %23, %24 : vector<8x64xf32>
    %cst_24 = arith.constant 0.000000e+00 : f32
    %26 = vector.broadcast %cst_24 : f32 to vector<8x64xf32>
    %27 = arith.maximumf %25, %26 : vector<8x64xf32>
    %c0_25 = arith.constant 0 : index
    %c0_26 = arith.constant 0 : index
    %28 = vector.load %arg9[%c0_25, %c0_26] : memref<64x128xf32, #tpu.memory_space<vmem>>, vector<64x128xf32>
    %c0_27 = arith.constant 0 : index
    %c0_28 = arith.constant 0 : index
    %29 = vector.load %arg10[%c0_27, %c0_28] : memref<1x128xf32, #tpu.memory_space<vmem>>, vector<1x128xf32>
    %cst_29 = arith.constant dense<0.000000e+00> : vector<8x128xf32>
    %30 = tpu.matmul %27, %28, %cst_29 {dimension_numbers = #tpu.dot_dimension_numbers<[1], [0], [0], [1], [0, 0, 1, 1], [], []>} : vector<8x64xf32>, vector<64x128xf32>, vector<8x128xf32> -> vector<8x128xf32>
    %31 = vector.broadcast %29 : vector<1x128xf32> to vector<8x128xf32>
    %32 = arith.addf %30, %31 : vector<8x128xf32>
    %cst_30 = arith.constant 0.000000e+00 : f32
    %33 = vector.broadcast %cst_30 : f32 to vector<8x128xf32>
    %34 = arith.maximumf %32, %33 : vector<8x128xf32>
    %c0_31 = arith.constant 0 : index
    %c0_32 = arith.constant 0 : index
    %35 = vector.load %arg7[%c0_31, %c0_32] : memref<128x256xf32, #tpu.memory_space<vmem>>, vector<128x256xf32>
    %c0_33 = arith.constant 0 : index
    %c0_34 = arith.constant 0 : index
    %36 = vector.load %arg8[%c0_33, %c0_34] : memref<1x256xf32, #tpu.memory_space<vmem>>, vector<1x256xf32>
    %cst_35 = arith.constant dense<0.000000e+00> : vector<8x256xf32>
    %37 = tpu.matmul %34, %35, %cst_35 {dimension_numbers = #tpu.dot_dimension_numbers<[1], [0], [0], [1], [0, 0, 1, 1], [], []>} : vector<8x128xf32>, vector<128x256xf32>, vector<8x256xf32> -> vector<8x256xf32>
    %38 = vector.broadcast %36 : vector<1x256xf32> to vector<8x256xf32>
    %39 = arith.addf %37, %38 : vector<8x256xf32>
    %c0_36 = arith.constant 0 : index
    %c0_37 = arith.constant 0 : index
    %40 = vector.load %arg14[%c0_36, %c0_37] : memref<8x256xf32, #tpu.memory_space<vmem>>, vector<8x256xf32>
    tpu.vector_store %arg14[%c0_36, %c0_37], %39 {strides = array<i32>} : memref<8x256xf32, #tpu.memory_space<vmem>>, vector<8x256xf32>,
    return
  }
}

</mosaic_0001>

<llo_original>
// kernel: tpu_custom_call.1
$region0: #{tpu_custom_call.1}
  #allocation0 [shape = 'u32[]', space=smem, size = 0x4, offset = 0x4, fixed_abs, tag = 'smem constant byte address 0x4 - core index']
  #allocation1 [shape = 'u32[72,128]{1,0:T(1,128)}', space=vmem, size = 0x9000, scoped, tag = 'internal scratch']
  %s0 = inlined_call_operand.vmem [shape: f32[8,256], index: 0, kind: input, shape index: {}]
  %s1 = inlined_call_operand.hbm [shape: f32[256,128], index: 1, kind: input, shape index: {}]
  %s2 = inlined_call_operand.vmem [shape: f32[1,128], index: 2, kind: input, shape index: {}]
  %s3 = inlined_call_operand.vmem [shape: f32[128,64], index: 3, kind: input, shape index: {}]
  %s4 = inlined_call_operand.vmem [shape: f32[1,64], index: 4, kind: input, shape index: {}]
  %s5 = inlined_call_operand.vmem [shape: f32[64,32], index: 5, kind: input, shape index: {}]
  %s6 = inlined_call_operand.vmem [shape: f32[1,32], index: 6, kind: input, shape index: {}]
  %s7 = inlined_call_operand.hbm [shape: f32[128,256], index: 7, kind: input, shape index: {}]
  %s8 = inlined_call_operand.vmem [shape: f32[1,256], index: 8, kind: input, shape index: {}]
  %s9 = inlined_call_operand.vmem [shape: f32[64,128], index: 9, kind: input, shape index: {}]
  %s10 = inlined_call_operand.vmem [shape: f32[1,128], index: 10, kind: input, shape index: {}]
  %s11 = inlined_call_operand.vmem [shape: f32[32,64], index: 11, kind: input, shape index: {}]
  %s12 = inlined_call_operand.vmem [shape: f32[1,64], index: 12, kind: input, shape index: {}]
  %s13 = inlined_call_operand.hbm [shape: f32[8,32], index: 13, kind: output, shape index: {0}]
  %s14 = inlined_call_operand.hbm [shape: f32[8,256], index: 14, kind: output, shape index: {1}]
  %15 = xla_tuple %s13, %s14
  %s16 = sld [smem:[#allocation0]]
  $region78: #{tpu_custom_call.1} parent=0
    _
  %s18 = ssub.s32 1, %s16
  %s19 = scalar_select 0, %s18, %s16
  $region1: #{tpu_custom_call.1} parent=0
    #allocation2 [shape = 'u8[131072]{0}', space=vmem, size = 0x20000, scoped, tag = 'input window, operand 1, single buffered']
    #allocation3 [shape = 's32[1]{0}', space=sflag, size = 0x4, scoped, tag = 'scoped memory for tpu_custom_call.1']
    #allocation4 [shape = 's32[1]{0}', space=sflag, size = 0x4, scoped, tag = 'scoped memory for tpu_custom_call.1']
    #allocation5 [shape = 'u8[131072]{0}', space=vmem, size = 0x20000, scoped, tag = 'input window, operand 7, single buffered']
    #allocation6 [shape = 's32[1]{0}', space=sflag, size = 0x4, scoped, tag = 'scoped memory for tpu_custom_call.1']
    #allocation7 [shape = 'u8[4096]{0}', space=vmem, size = 0x1000, scoped, tag = 'output window, operand 0, single buffered']
    #allocation8 [shape = 'u8[8192]{0}', space=vmem, size = 0x2000, scoped, tag = 'output window, operand 1, single buffered']
    #allocation9 [shape = 's32[1]{0}', space=sflag, size = 0x4, scoped, tag = 'scoped memory for tpu_custom_call.1']
    %20 = vsyncpa [#allocation3], 0
    %21 = vsyncpa [#allocation6], 0
    %22 = vsyncpa [#allocation4], 0
    %23 = vsyncpa [#allocation9], 0
    // Predicated region
    $region2: #{tpu_custom_call.1} parent=1 // pred_check
      _
    $region3: #{tpu_custom_call.1} parent=1 // pred_check_branch
      %25 = sbr.rel (0) target = $region5
    $region4: #{tpu_custom_call.1} parent=1 // pred_region
      _
    $region5: #{tpu_custom_call.1} parent=1 // pred_fallthru
      _
    // Predicated region
    $region6: #{tpu_custom_call.1} parent=1 // pred_check
      _
    $region7: #{tpu_custom_call.1} parent=1 // pred_check_branch
      %27 = sbr.rel (0) target = $region9
    $region8: #{tpu_custom_call.1} parent=1 // pred_region
      %29 = vsyncadd [#allocation3], 0
      %s30 = sshll.u32 %s1, 4
      %s31 = int_to_ptr.hbm [resolvable:$true] %s30
      %s32 = sshll.u32 [#allocation2], 4
      %s33 = int_to_ptr.vmem [resolvable:$true] %s32
      %38 = dma.hbm_to_vmem [thread:$0]  %s31, 4096, %s33, [#allocation3], 128, 128, 8
    $region9: #{tpu_custom_call.1} parent=1 // pred_fallthru
      _
    // Predicated region
    $region10: #{tpu_custom_call.1} parent=1 // pred_check
      _
    $region11: #{tpu_custom_call.1} parent=1 // pred_check_branch
      %40 = sbr.rel (0) target = $region13
    $region12: #{tpu_custom_call.1} parent=1 // pred_region
      _
    $region13: #{tpu_custom_call.1} parent=1 // pred_fallthru
      _
    // Predicated region
    $region14: #{tpu_custom_call.1} parent=1 // pred_check
      _
    $region15: #{tpu_custom_call.1} parent=1 // pred_check_branch
      %42 = sbr.rel (0) target = $region17
    $region16: #{tpu_custom_call.1} parent=1 // pred_region
      _
    $region17: #{tpu_custom_call.1} parent=1 // pred_fallthru
      _
    // Predicated region
    $region18: #{tpu_custom_call.1} parent=1 // pred_check
      _
    $region19: #{tpu_custom_call.1} parent=1 // pred_check_branch
      %44 = sbr.rel (0) target = $region21
    $region20: #{tpu_custom_call.1} parent=1 // pred_region
      _
    $region21: #{tpu_custom_call.1} parent=1 // pred_fallthru
      _
    // Predicated region
    $region22: #{tpu_custom_call.1} parent=1 // pred_check
      _
    $region23: #{tpu_custom_call.1} parent=1 // pred_check_branch
      %46 = sbr.rel (0) target = $region25
    $region24: #{tpu_custom_call.1} parent=1 // pred_region
      _
    $region25: #{tpu_custom_call.1} parent=1 // pred_fallthru
      _
    // Predicated region
    $region26: #{tpu_custom_call.1} parent=1 // pred_check
      _
    $region27: #{tpu_custom_call.1} parent=1 // pred_check_branch
      %48 = sbr.rel (0) target = $region29
    $region28: #{tpu_custom_call.1} parent=1 // pred_region
      _
    $region29: #{tpu_custom_call.1} parent=1 // pred_fallthru
      _
    // Predicated region
    $region30: #{tpu_custom_call.1} parent=1 // pred_check
      _
    $region31: #{tpu_custom_call.1} parent=1 // pred_check_branch
      %50 = sbr.rel (0) target = $region33
    $region32: #{tpu_custom_call.1} parent=1 // pred_region
      %52 = vsyncadd [#allocation6], 0
      %s53 = sshll.u32 %s7, 4
      %s54 = int_to_ptr.hbm [resolvable:$true] %s53
      %s55 = sshll.u32 [#allocation5], 4
      %s56 = int_to_ptr.vmem [resolvable:$true] %s55
      %61 = dma.hbm_to_vmem [thread:$0]  %s54, 4096, %s56, [#allocation6], 256, 256, 16
    $region33: #{tpu_custom_call.1} parent=1 // pred_fallthru
      _
    // Predicated region
    $region34: #{tpu_custom_call.1} parent=1 // pred_check
      _
    $region35: #{tpu_custom_call.1} parent=1 // pred_check_branch
      %63 = sbr.rel (0) target = $region37
    $region36: #{tpu_custom_call.1} parent=1 // pred_region
      _
    $region37: #{tpu_custom_call.1} parent=1 // pred_fallthru
      _
    // Predicated region
    $region38: #{tpu_custom_call.1} parent=1 // pred_check
      _
    $region39: #{tpu_custom_call.1} parent=1 // pred_check_branch
      %65 = sbr.rel (0) target = $region41
    $region40: #{tpu_custom_call.1} parent=1 // pred_region
      _
    $region41: #{tpu_custom_call.1} parent=1 // pred_fallthru
      _
    // Predicated region
    $region42: #{tpu_custom_call.1} parent=1 // pred_check
      _
    $region43: #{tpu_custom_call.1} parent=1 // pred_check_branch
      %67 = sbr.rel (0) target = $region45
    $region44: #{tpu_custom_call.1} parent=1 // pred_region
      _
    $region45: #{tpu_custom_call.1} parent=1 // pred_fallthru
      _
    // Predicated region
    $region46: #{tpu_custom_call.1} parent=1 // pred_check
      _
    $region47: #{tpu_custom_call.1} parent=1 // pred_check_branch
      %69 = sbr.rel (0) target = $region49
    $region48: #{tpu_custom_call.1} parent=1 // pred_region
      _
    $region49: #{tpu_custom_call.1} parent=1 // pred_fallthru
      _
    // Predicated region
    $region50: #{tpu_custom_call.1} parent=1 // pred_check
      _
    $region51: #{tpu_custom_call.1} parent=1 // pred_check_branch
      %71 = sbr.rel (0) target = $region53
    $region52: #{tpu_custom_call.1} parent=1 // pred_region
      _
    $region53: #{tpu_custom_call.1} parent=1 // pred_fallthru
      _
    // Predicated region
    $region54: #{tpu_custom_call.1} parent=1 // pred_check
      _
    $region55: #{tpu_custom_call.1} parent=1 // pred_check_branch
      %73 = sbr.rel (0) target = $region57
    $region56: #{tpu_custom_call.1} parent=1 // pred_region
      %75 = dma.done [#allocation3], 4096
    $region57: #{tpu_custom_call.1} parent=1 // pred_fallthru
      _
    // Predicated region
    $region58: #{tpu_custom_call.1} parent=1 // pred_check
      _
    $region59: #{tpu_custom_call.1} parent=1 // pred_check_branch
      %77 = sbr.rel (0) target = $region61
    $region60: #{tpu_custom_call.1} parent=1 // pred_region
      %79 = dma.done [#allocation6], 4096
    $region61: #{tpu_custom_call.1} parent=1 // pred_fallthru
      _
    %v80 = vld [vmem:[%s0] sm:$0xff]
    %v81 = vld [vmem:[%s0 + $0x8] sm:$0xff]
    %v82 = vld [vmem:[#allocation2] sm:$0xff]
    %v83 = vld [vmem:[#allocation2 + $0x8] sm:$0xff]
    %v84 = vld [vmem:[#allocation2 + $0x10] sm:$0xff]
    %v85 = vld [vmem:[#allocation2 + $0x18] sm:$0xff]
    %v86 = vld [vmem:[#allocation2 + $0x20] sm:$0xff]
    %v87 = vld [vmem:[#allocation2 + $0x28] sm:$0xff]
    %v88 = vld [vmem:[#allocation2 + $0x30] sm:$0xff]
    %v89 = vld [vmem:[#allocation2 + $0x38] sm:$0xff]
    %v90 = vld [vmem:[#allocation2 + $0x40] sm:$0xff]
    %v91 = vld [vmem:[#allocation2 + $0x48] sm:$0xff]
    %v92 = vld [vmem:[#allocation2 + $0x50] sm:$0xff]
    %v93 = vld [vmem:[#allocation2 + $0x58] sm:$0xff]
    %v94 = vld [vmem:[#allocation2 + $0x60] sm:$0xff]
    %v95 = vld [vmem:[#allocation2 + $0x68] sm:$0xff]
    %v96 = vld [vmem:[#allocation2 + $0x70] sm:$0xff]
    %v97 = vld [vmem:[#allocation2 + $0x78] sm:$0xff]
    %v98 = vld [vmem:[#allocation2 + $0x80] sm:$0xff]
    %v99 = vld [vmem:[#allocation2 + $0x88] sm:$0xff]
    %v100 = vld [vmem:[#allocation2 + $0x90] sm:$0xff]
    %v101 = vld [vmem:[#allocation2 + $0x98] sm:$0xff]
    %v102 = vld [vmem:[#allocation2 + $0xa0] sm:$0xff]
    %v103 = vld [vmem:[#allocation2 + $0xa8] sm:$0xff]
    %v104 = vld [vmem:[#allocation2 + $0xb0] sm:$0xff]
    %v105 = vld [vmem:[#allocation2 + $0xb8] sm:$0xff]
    %v106 = vld [vmem:[#allocation2 + $0xc0] sm:$0xff]
    %v107 = vld [vmem:[#allocation2 + $0xc8] sm:$0xff]
    %v108 = vld [vmem:[#allocation2 + $0xd0] sm:$0xff]
    %v109 = vld [vmem:[#allocation2 + $0xd8] sm:$0xff]
    %v110 = vld [vmem:[#allocation2 + $0xe0] sm:$0xff]
    %v111 = vld [vmem:[#allocation2 + $0xe8] sm:$0xff]
    %v112 = vld [vmem:[#allocation2 + $0xf0] sm:$0xff]
    %v113 = vld [vmem:[#allocation2 + $0xf8] sm:$0xff]
    %v114 = vld [vmem:[%s2] sm:$0x1]
    %v116 = vperm.slane %v114, 0
    %118 = vmatpush.msra.mxu0 %v97
    %119 = vmatpush.msra.mxu0 %v96
    %120 = vmatpush.msra.mxu0 %v95
    %121 = vmatpush.msra.mxu0 %v94
    %122 = vmatpush.msra.mxu0 %v93
    %123 = vmatpush.msra.mxu0 %v92
    %124 = vmatpush.msra.mxu0 %v91
    %125 = vmatpush.msra.mxu0 %v90
    %126 = vmatpush.msra.mxu0 %v89
    %127 = vmatpush.msra.mxu0 %v88
    %128 = vmatpush.msra.mxu0 %v87
    %129 = vmatpush.msra.mxu0 %v86
    %130 = vmatpush.msra.mxu0 %v85
    %131 = vmatpush.msra.mxu0 %v84
    %132 = vmatpush.msra.mxu0 %v83
    %133 = vmatpush.msra.mxu0 %v82
    %134 = vmatmul.f32.gmra.mxu0 %v80
    %v135 = vpop.f32.mrf.mxu0
    %v136 = vadd.f32 %v116, %v135
    %137 = vdwg.mxu0
    %138 = vmatpush.msra.mxu0 %v113
    %139 = vmatpush.msra.mxu0 %v112
    %140 = vmatpush.msra.mxu0 %v111
    %141 = vmatpush.msra.mxu0 %v110
    %142 = vmatpush.msra.mxu0 %v109
    %143 = vmatpush.msra.mxu0 %v108
    %144 = vmatpush.msra.mxu0 %v107
    %145 = vmatpush.msra.mxu0 %v106
    %146 = vmatpush.msra.mxu0 %v105
    %147 = vmatpush.msra.mxu0 %v104
    %148 = vmatpush.msra.mxu0 %v103
    %149 = vmatpush.msra.mxu0 %v102
    %150 = vmatpush.msra.mxu0 %v101
    %151 = vmatpush.msra.mxu0 %v100
    %152 = vmatpush.msra.mxu0 %v99
    %153 = vmatpush.msra.mxu0 %v98
    %154 = vmatmul.f32.gmra.mxu0 %v81
    %v155 = vpop.f32.mrf.mxu0
    %v156 = vadd.f32 %v136, %v155
    %157 = vdwg.mxu0
    %v158 = vmax.f32 %v156, 0.0
    %v159 = vld [vmem:[%s3] sm:$0xff]
    %v160 = vld [vmem:[%s3 + $0x8] sm:$0xff]
    %v161 = vld [vmem:[%s3 + $0x10] sm:$0xff]
    %v162 = vld [vmem:[%s3 + $0x18] sm:$0xff]
    %v163 = vld [vmem:[%s3 + $0x20] sm:$0xff]
    %v164 = vld [vmem:[%s3 + $0x28] sm:$0xff]
    %v165 = vld [vmem:[%s3 + $0x30] sm:$0xff]
    %v166 = vld [vmem:[%s3 + $0x38] sm:$0xff]
    %v167 = vld [vmem:[%s3 + $0x40] sm:$0xff]
    %v168 = vld [vmem:[%s3 + $0x48] sm:$0xff]
    %v169 = vld [vmem:[%s3 + $0x50] sm:$0xff]
    %v170 = vld [vmem:[%s3 + $0x58] sm:$0xff]
    %v171 = vld [vmem:[%s3 + $0x60] sm:$0xff]
    %v172 = vld [vmem:[%s3 + $0x68] sm:$0xff]
    %v173 = vld [vmem:[%s3 + $0x70] sm:$0xff]
    %v174 = vld [vmem:[%s3 + $0x78] sm:$0xff]
    %v175 = vld [vmem:[%s4] sm:$0x1]
    %v177 = vperm.slane %v175, 0
    %179 = vmatpush.msra.mxu0 %v174
    %180 = vmatpush.msra.mxu0 %v173
    %181 = vmatpush.msra.mxu0 %v172
    %182 = vmatpush.msra.mxu0 %v171
    %183 = vmatpush.msra.mxu0 %v170
    %184 = vmatpush.msra.mxu0 %v169
    %185 = vmatpush.msra.mxu0 %v168
    %186 = vmatpush.msra.mxu0 %v167
    %187 = vmatpush.msra.mxu0 %v166
    %188 = vmatpush.msra.mxu0 %v165
    %189 = vmatpush.msra.mxu0 %v164
    %190 = vmatpush.msra.mxu0 %v163
    %191 = vmatpush.msra.mxu0 %v162
    %192 = vmatpush.msra.mxu0 %v161
    %193 = vmatpush.msra.mxu0 %v160
    %194 = vmatpush.msra.mxu0 %v159
    %195 = vmatmul.f32.gmra.mxu0 %v158
    %v196 = vpop.f32.mrf.mxu0
    %v197 = vadd.f32 %v177, %v196
    %198 = vdwg.mxu0
    %v199 = vmax.f32 %v197, 0.0
    %v200 = vld [vmem:[%s5] sm:$0xff]
    %v201 = vld [vmem:[%s5 + $0x8] sm:$0xff]
    %v202 = vld [vmem:[%s5 + $0x10] sm:$0xff]
    %v203 = vld [vmem:[%s5 + $0x18] sm:$0xff]
    %v204 = vld [vmem:[%s5 + $0x20] sm:$0xff]
    %v205 = vld [vmem:[%s5 + $0x28] sm:$0xff]
    %v206 = vld [vmem:[%s5 + $0x30] sm:$0xff]
    %v207 = vld [vmem:[%s5 + $0x38] sm:$0xff]
    %v208 = vld [vmem:[%s6] sm:$0x1]
    %v210 = vperm.slane %v208, 0
    %vm212 = vcmask 523264
    %v214 = vsel %vm212, %v199, 0
    %216 = vmatpush.msra.mxu0 0.0
    %217 = vmatpush.msra.mxu0 0.0
    %218 = vmatpush.msra.mxu0 0.0
    %219 = vmatpush.msra.mxu0 0.0
    %220 = vmatpush.msra.mxu0 0.0
    %221 = vmatpush.msra.mxu0 0.0
    %222 = vmatpush.msra.mxu0 0.0
    %223 = vmatpush.msra.mxu0 0.0
    %224 = vmatpush.msra.mxu0 %v207
    %225 = vmatpush.msra.mxu0 %v206
    %226 = vmatpush.msra.mxu0 %v205
    %227 = vmatpush.msra.mxu0 %v204
    %228 = vmatpush.msra.mxu0 %v203
    %229 = vmatpush.msra.mxu0 %v202
    %230 = vmatpush.msra.mxu0 %v201
    %231 = vmatpush.msra.mxu0 %v200
    %232 = vmatmul.f32.gmra.mxu0 %v214
    %v233 = vpop.f32.mrf.mxu0
    %v234 = vadd.f32 %v210, %v233
    %235 = vdwg.mxu0
    %vm236 = vcmask 261120
    %237 = vst.msk [vmem:[#allocation7] sm:$0xff] %vm236, %v234
    %v238 = vld [vmem:[%s11] sm:$0xff]
    %v239 = vld [vmem:[%s11 + $0x8] sm:$0xff]
    %v240 = vld [vmem:[%s11 + $0x10] sm:$0xff]
    %v241 = vld [vmem:[%s11 + $0x18] sm:$0xff]
    %v242 = vld [vmem:[%s12] sm:$0x1]
    %v244 = vperm.slane %v242, 0
    %v247 = vsel %vm236, %v234, 0
    %249 = vmatpush.msra.mxu0 0.0
    %250 = vmatpush.msra.mxu0 0.0
    %251 = vmatpush.msra.mxu0 0.0
    %252 = vmatpush.msra.mxu0 0.0
    %253 = vmatpush.msra.mxu0 0.0
    %254 = vmatpush.msra.mxu0 0.0
    %255 = vmatpush.msra.mxu0 0.0
    %256 = vmatpush.msra.mxu0 0.0
    %257 = vmatpush.msra.mxu0 0.0
    %258 = vmatpush.msra.mxu0 0.0
    %259 = vmatpush.msra.mxu0 0.0
    %260 = vmatpush.msra.mxu0 0.0
    %261 = vmatpush.msra.mxu0 %v241
    %262 = vmatpush.msra.mxu0 %v240
    %263 = vmatpush.msra.mxu0 %v239
    %264 = vmatpush.msra.mxu0 %v238
    %265 = vmatmul.f32.gmra.mxu0 %v247
    %v266 = vpop.f32.mrf.mxu0
    %v267 = vadd.f32 %v244, %v266
    %268 = vdwg.mxu0
    %v269 = vmax.f32 %v267, 0.0
    %v270 = vld [vmem:[%s9] sm:$0xff]
    %v271 = vld [vmem:[%s9 + $0x8] sm:$0xff]
    %v272 = vld [vmem:[%s9 + $0x10] sm:$0xff]
    %v273 = vld [vmem:[%s9 + $0x18] sm:$0xff]
    %v274 = vld [vmem:[%s9 + $0x20] sm:$0xff]
    %v275 = vld [vmem:[%s9 + $0x28] sm:$0xff]
    %v276 = vld [vmem:[%s9 + $0x30] sm:$0xff]
    %v277 = vld [vmem:[%s9 + $0x38] sm:$0xff]
    %v278 = vld [vmem:[%s10] sm:$0x1]
    %v280 = vperm.slane %v278, 0
    %v283 = vsel %vm212, %v269, 0
    %285 = vmatpush.msra.mxu0 0.0
    %286 = vmatpush.msra.mxu0 0.0
    %287 = vmatpush.msra.mxu0 0.0
    %288 = vmatpush.msra.mxu0 0.0
    %289 = vmatpush.msra.mxu0 0.0
    %290 = vmatpush.msra.mxu0 0.0
    %291 = vmatpush.msra.mxu0 0.0
    %292 = vmatpush.msra.mxu0 0.0
    %293 = vmatpush.msra.mxu0 %v277
    %294 = vmatpush.msra.mxu0 %v276
    %295 = vmatpush.msra.mxu0 %v275
    %296 = vmatpush.msra.mxu0 %v274
    %297 = vmatpush.msra.mxu0 %v273
    %298 = vmatpush.msra.mxu0 %v272
    %299 = vmatpush.msra.mxu0 %v271
    %300 = vmatpush.msra.mxu0 %v270
    %301 = vmatmul.f32.gmra.mxu0 %v283
    %v302 = vpop.f32.mrf.mxu0
    %v303 = vadd.f32 %v280, %v302
    %304 = vdwg.mxu0
    %v305 = vmax.f32 %v303, 0.0
    %v306 = vld [vmem:[#allocation5] sm:$0xff]
    %v307 = vld [vmem:[#allocation5 + $0x8] sm:$0xff]
    %v308 = vld [vmem:[#allocation5 + $0x10] sm:$0xff]
    %v309 = vld [vmem:[#allocation5 + $0x18] sm:$0xff]
    %v310 = vld [vmem:[#allocation5 + $0x20] sm:$0xff]
    %v311 = vld [vmem:[#allocation5 + $0x28] sm:$0xff]
    %v312 = vld [vmem:[#allocation5 + $0x30] sm:$0xff]
    %v313 = vld [vmem:[#allocation5 + $0x38] sm:$0xff]
    %v314 = vld [vmem:[#allocation5 + $0x40] sm:$0xff]
    %v315 = vld [vmem:[#allocation5 + $0x48] sm:$0xff]
    %v316 = vld [vmem:[#allocation5 + $0x50] sm:$0xff]
    %v317 = vld [vmem:[#allocation5 + $0x58] sm:$0xff]
    %v318 = vld [vmem:[#allocation5 + $0x60] sm:$0xff]
    %v319 = vld [vmem:[#allocation5 + $0x68] sm:$0xff]
    %v320 = vld [vmem:[#allocation5 + $0x70] sm:$0xff]
    %v321 = vld [vmem:[#allocation5 + $0x78] sm:$0xff]
    %v322 = vld [vmem:[#allocation5 + $0x80] sm:$0xff]
    %v323 = vld [vmem:[#allocation5 + $0x88] sm:$0xff]
    %v324 = vld [vmem:[#allocation5 + $0x90] sm:$0xff]
    %v325 = vld [vmem:[#allocation5 + $0x98] sm:$0xff]
    %v326 = vld [vmem:[#allocation5 + $0xa0] sm:$0xff]
    %v327 = vld [vmem:[#allocation5 + $0xa8] sm:$0xff]
    %v328 = vld [vmem:[#allocation5 + $0xb0] sm:$0xff]
    %v329 = vld [vmem:[#allocation5 + $0xb8] sm:$0xff]
    %v330 = vld [vmem:[#allocation5 + $0xc0] sm:$0xff]
    %v331 = vld [vmem:[#allocation5 + $0xc8] sm:$0xff]
    %v332 = vld [vmem:[#allocation5 + $0xd0] sm:$0xff]
    %v333 = vld [vmem:[#allocation5 + $0xd8] sm:$0xff]
    %v334 = vld [vmem:[#allocation5 + $0xe0] sm:$0xff]
    %v335 = vld [vmem:[#allocation5 + $0xe8] sm:$0xff]
    %v336 = vld [vmem:[#allocation5 + $0xf0] sm:$0xff]
    %v337 = vld [vmem:[#allocation5 + $0xf8] sm:$0xff]
    %v338 = vld [vmem:[%s8] sm:$0x3]
    %v340 = vperm.slane %v338, 0
    %v341 = vperm.slane %v338, 1
    %344 = vmatpush.msra.mxu0 %v336
    %345 = vmatpush.msra.mxu0 %v334
    %346 = vmatpush.msra.mxu0 %v332
    %347 = vmatpush.msra.mxu0 %v330
    %348 = vmatpush.msra.mxu0 %v328
    %349 = vmatpush.msra.mxu0 %v326
    %350 = vmatpush.msra.mxu0 %v324
    %351 = vmatpush.msra.mxu0 %v322
    %352 = vmatpush.msra.mxu0 %v320
    %353 = vmatpush.msra.mxu0 %v318
    %354 = vmatpush.msra.mxu0 %v316
    %355 = vmatpush.msra.mxu0 %v314
    %356 = vmatpush.msra.mxu0 %v312
    %357 = vmatpush.msra.mxu0 %v310
    %358 = vmatpush.msra.mxu0 %v308
    %359 = vmatpush.msra.mxu0 %v306
    %360 = vmatmul.f32.gmra.mxu0 %v305
    %v361 = vpop.f32.mrf.mxu0
    %v362 = vadd.f32 %v340, %v361
    %363 = vdwg.mxu0
    %364 = vmatpush.msra.mxu0 %v337
    %365 = vmatpush.msra.mxu0 %v335
    %366 = vmatpush.msra.mxu0 %v333
    %367 = vmatpush.msra.mxu0 %v331
    %368 = vmatpush.msra.mxu0 %v329
    %369 = vmatpush.msra.mxu0 %v327
    %370 = vmatpush.msra.mxu0 %v325
    %371 = vmatpush.msra.mxu0 %v323
    %372 = vmatpush.msra.mxu0 %v321
    %373 = vmatpush.msra.mxu0 %v319
    %374 = vmatpush.msra.mxu0 %v317
    %375 = vmatpush.msra.mxu0 %v315
    %376 = vmatpush.msra.mxu0 %v313
    %377 = vmatpush.msra.mxu0 %v311
    %378 = vmatpush.msra.mxu0 %v309
    %379 = vmatpush.msra.mxu0 %v307
    %380 = vmatmul.f32.gmra.mxu0 %v305
    %v381 = vpop.f32.mrf.mxu0
    %v382 = vadd.f32 %v341, %v381
    %383 = vdwg.mxu0
    %384 = vst [vmem:[#allocation8] sm:$0xff] %v362
    %385 = vst [vmem:[#allocation8 + $0x8] sm:$0xff] %v382
    // Predicated region
    $region62: #{tpu_custom_call.1} parent=1 // pred_check
      _
    $region63: #{tpu_custom_call.1} parent=1 // pred_check_branch
      %387 = sbr.rel (0) target = $region65
    $region64: #{tpu_custom_call.1} parent=1 // pred_region
      %389 = vsyncadd [#allocation4], 0
      %s391 = sshll.u32 [#allocation7], 4
      %s392 = int_to_ptr.vmem [resolvable:$true] %s391
      %s393 = sshll.u32 %s13, 4
      %s394 = int_to_ptr.hbm [resolvable:$true] %s393
      %396 = dma.vmem_to_hbm [thread:$0]  %s392, 128, %s394, [#allocation4]
    $region65: #{tpu_custom_call.1} parent=1 // pred_fallthru
      _
    // Predicated region
    $region66: #{tpu_custom_call.1} parent=1 // pred_check
      _
    $region67: #{tpu_custom_call.1} parent=1 // pred_check_branch
      %398 = sbr.rel (0) target = $region69
    $region68: #{tpu_custom_call.1} parent=1 // pred_region
      %400 = vsyncadd [#allocation9], 0
      %s402 = sshll.u32 [#allocation8], 4
      %s403 = int_to_ptr.vmem [resolvable:$true] %s402
      %s404 = sshll.u32 %s14, 4
      %s405 = int_to_ptr.hbm [resolvable:$true] %s404
      %407 = dma.vmem_to_hbm [thread:$0]  %s403, 256, %s405, [#allocation9]
    $region69: #{tpu_custom_call.1} parent=1 // pred_fallthru
      _
    // Predicated region
    $region70: #{tpu_custom_call.1} parent=1 // pred_check
      _
    $region71: #{tpu_custom_call.1} parent=1 // pred_check_branch
      %409 = sbr.rel (0) target = $region73
    $region72: #{tpu_custom_call.1} parent=1 // pred_region
      %411 = dma.done [#allocation4], 128
    $region73: #{tpu_custom_call.1} parent=1 // pred_fallthru
      _
    // Predicated region
    $region74: #{tpu_custom_call.1} parent=1 // pred_check
      _
    $region75: #{tpu_custom_call.1} parent=1 // pred_check_branch
      %413 = sbr.rel (0) target = $region77
    $region76: #{tpu_custom_call.1} parent=1 // pred_region
      %415 = dma.done [#allocation9], 256
    $region77: #{tpu_custom_call.1} parent=1 // pred_fallthru
      _
    %416 = vsyncpa [#allocation3], 1
    %417 = vsyncpa [#allocation6], 1
    %418 = vsyncpa [#allocation4], 1
    %419 = vsyncpa [#allocation9], 1

</llo_original>
